<compile_context>
chip_gen: v6e
topology: v6e:2x2x1
jax: 0.10.0
libtpu: 0.0.40
codegen_flags: <defaults>
</compile_context>

<pallas_src>
import jax
import jax.numpy as jnp
from jax.experimental import pallas as pl
from jax.experimental.pallas import tpu as pltpu


def _mlp_kernel(x_ref, w1_ref, b1_ref, w2p_ref, b2_ref, o_ref):
    # ---- Layer 1: Linear + ReLU (MXU, bf16 inputs, f32 accumulate) ----
    x = x_ref[...].astype(jnp.bfloat16)
    h = jnp.dot(x, w1_ref[...], preferred_element_type=jnp.float32)   # (tm, H) f32
    h = jnp.maximum(h + b1_ref[...], 0.0)                             # f32 VPU epilogue

    # ---- Layer 2: Linear(H, 1) + Sigmoid, emitted as a lane-dense row ----
    # w2p is the (H, 1) weight laid out as an (8, H) row block (row 0 = real
    # weights, rows 1..7 = 0).  Contracting both operands over H (the q@k^T
    # form) yields (8, tm): the logits already transposed onto lanes.  Summing
    # away the 7 exactly-zero rows keeps everything in well-supported 2-D
    # layouts and avoids a (tm, 1) masked-store output path.
    logits8 = jax.lax.dot_general(
        w2p_ref[...], h.astype(jnp.bfloat16),
        dimension_numbers=(((1,), (1,)), ((), ())),
        preferred_element_type=jnp.float32)                           # (8, tm)
    logits = jnp.sum(logits8, axis=0, keepdims=True) + b2_ref[0, 0]   # (1, tm)
    o_ref[...] = jax.nn.sigmoid(logits).astype(o_ref.dtype)


def _round_up(n, m):
    return ((n + m - 1) // m) * m


def _pad_axis(a, axis, mult):
    pad = (-a.shape[axis]) % mult
    if pad == 0:
        return a
    widths = [(0, 0)] * a.ndim
    widths[axis] = (0, pad)
    return jnp.pad(a, widths)


def discriminator_xs_forward(x, w1, b1, w2, b2, *, tm=None, lane_multiple=128):
    """Forward pass of discriminator_xs as a single Pallas kernel.

    x  : (B, x_dim) float32     w1 : (x_dim, H)   b1 : (1, H)
    w2 : (H, 1)                 b2 : (1, 1)
    returns (B, 1) float32 in [0, 1]
    """
    B, x_dim = x.shape
    H = w1.shape[-1]

    # Batch tile: big enough to fill the MXU and amortize ~0.35us/grid-step
    # overhead, but keep >= 2 grid steps when B allows so both v7x TensorCores
    # get work through the parallel grid axis.
    if tm is None:
        tm = max(128, min(1024, _round_up(pl.cdiv(B, 2), 128)))
    else:
        tm = max(128, _round_up(tm, 128))
    B_pad = _round_up(B, tm)
    n_tiles = B_pad // tm

    # Zero-pad feature dims to lane multiples (exact: padded cols/rows are 0)
    # and the batch to the tile size (padded rows are sliced off at the end).
    xp = _pad_axis(_pad_axis(x, 0, tm), 1, lane_multiple)                       # (B_pad, xdp)
    w1p = _pad_axis(_pad_axis(w1, 0, lane_multiple), 1, lane_multiple)
    w1p = w1p.astype(jnp.bfloat16)                                              # (xdp, Hp)
    b1p = _pad_axis(b1.reshape(1, H), 1, lane_multiple).astype(jnp.float32)     # (1, Hp)
    w2r = _pad_axis(w2.reshape(1, H), 1, lane_multiple)
    w2p = jnp.pad(w2r, ((0, 7), (0, 0))).astype(jnp.bfloat16)                   # (8, Hp)
    b2s = b2.reshape(1, 1).astype(jnp.float32)                                  # (1, 1) -> SMEM
    xdp, Hp = xp.shape[1], w1p.shape[1]

    out_row = pl.pallas_call(
        _mlp_kernel,
        out_shape=jax.ShapeDtypeStruct((1, B_pad), jnp.float32),
        grid_spec=pltpu.PrefetchScalarGridSpec(
            num_scalar_prefetch=0,
            grid=(n_tiles,),
            in_specs=[
                pl.BlockSpec((tm, xdp), lambda i: (i, 0)),           # X batch tile
                pl.BlockSpec((xdp, Hp), lambda i: (0, 0)),           # W1 (resident)
                pl.BlockSpec((1, Hp), lambda i: (0, 0)),             # b1
                pl.BlockSpec((8, Hp), lambda i: (0, 0)),             # W2 row block
                pl.BlockSpec(memory_space=pltpu.MemorySpace.SMEM),   # b2 scalar
            ],
            out_specs=pl.BlockSpec((1, tm), lambda i: (0, i)),       # lane-dense row
        ),
        compiler_params=pltpu.CompilerParams(
            dimension_semantics=("parallel",),
            # Weights + a 1024-row X tile stay well under the default scoped
            # VMEM even at the real model size (x_dim=2048, H=1200->1280).
        ),
    )(xp, w1p, b1p, w2p, b2s)

    return out_row.reshape(B_pad, 1)[:B]


def _init_params(key, x_dim, hidden):
    # Deterministic synthetic init (PyTorch-Linear-like uniform fan_in scaling).
    k1, k2, k3, k4 = jax.random.split(key, 4)
    s1 = 1.0 / jnp.sqrt(x_dim)
    s2 = 1.0 / jnp.sqrt(hidden)
    w1 = jax.random.uniform(k1, (x_dim, hidden), jnp.float32, -s1, s1)
    b1 = jax.random.uniform(k2, (1, hidden), jnp.float32, -s1, s1)
    w2 = jax.random.uniform(k3, (hidden, 1), jnp.float32, -s2, s2)
    b2 = jax.random.uniform(k4, (1, 1), jnp.float32, -s2, s2)
    return w1, b1, w2, b2


if __name__ == "__main__":
    # Small config consistent with the module (scaled-down x_dim / hidden);
    # B=512 gives a 2-step parallel grid (tm=256).
    B, X_DIM, HIDDEN = 512, 256, 128

    key = jax.random.PRNGKey(0)
    kx, kp = jax.random.split(key)
    x = jax.random.normal(kx, (B, X_DIM), jnp.float32)
    w1, b1, w2, b2 = _init_params(kp, X_DIM, HIDDEN)

    out = discriminator_xs_forward(x, w1, b1, w2, b2)
    out = jax.block_until_ready(out)

    # Pure-JAX f32 reference (same math as the PyTorch forward). The kernel
    # feeds the matmuls in bf16 (f32 accumulation), so use a loose tolerance.
    ref = jax.nn.sigmoid(jnp.maximum(x @ w1 + b1, 0.0) @ w2 + b2)
    assert out.shape == (B, 1)
    assert jnp.allclose(out, ref, atol=2e-2, rtol=2e-2), float(jnp.max(jnp.abs(out - ref)))

    print("KERNEL_OK")
</pallas_src>

<mosaic_0001>
module attributes {stable_mosaic.version = 11 : i64} {
  func.func @_mlp_kernel(%arg0: i32, %arg1: memref<256x256xf32, #tpu.memory_space<vmem>>, %arg2: memref<256x128xbf16, #tpu.memory_space<vmem>>, %arg3: memref<1x128xf32, #tpu.memory_space<vmem>>, %arg4: memref<8x128xbf16, #tpu.memory_space<vmem>>, %arg5: memref<1x1xf32, #tpu.memory_space<smem>>, %arg6: memref<1x256xf32, #tpu.memory_space<vmem>>) attributes {dimension_semantics = [#tpu.dimension_semantics<parallel>], iteration_bounds = array<i64: 2>, scalar_prefetch = 0 : i64, scratch_operands = 0 : i64, tpu.core_type = #tpu.core_type<tc>, window_params = [{transform_indices = @transform_0, window_bounds = array<i64: 256, 256>}, {pipeline_mode = #tpu.pipeline_mode<synchronous>, transform_indices = @transform_1, window_bounds = array<i64: 256, 128>}, {pipeline_mode = #tpu.pipeline_mode<synchronous>, transform_indices = @transform_2, window_bounds = array<i64: 1, 128>}, {pipeline_mode = #tpu.pipeline_mode<synchronous>, transform_indices = @transform_3, window_bounds = array<i64: 8, 128>}, {transform_indices = @transform_4, window_bounds = array<i64: 1, 1>}, {transform_indices = @transform_5, window_bounds = array<i64: 1, 256>}]} {
    %c0 = arith.constant 0 : index
    %c0_0 = arith.constant 0 : index
    %0 = vector.load %arg1[%c0, %c0_0] : memref<256x256xf32, #tpu.memory_space<vmem>>, vector<256x256xf32>
    %1 = arith.truncf %0 : vector<256x256xf32> to vector<256x256xbf16>
    %c0_1 = arith.constant 0 : index
    %c0_2 = arith.constant 0 : index
    %2 = vector.load %arg2[%c0_1, %c0_2] : memref<256x128xbf16, #tpu.memory_space<vmem>>, vector<256x128xbf16>
    %cst = arith.constant dense<0.000000e+00> : vector<256x128xf32>
    %3 = tpu.matmul %1, %2, %cst {dimension_numbers = #tpu.dot_dimension_numbers<[1], [0], [0], [1], [0, 0, 1, 1], [], []>} : vector<256x256xbf16>, vector<256x128xbf16>, vector<256x128xf32> -> vector<256x128xf32>
    %c0_3 = arith.constant 0 : index
    %c0_4 = arith.constant 0 : index
    %4 = vector.load %arg3[%c0_3, %c0_4] : memref<1x128xf32, #tpu.memory_space<vmem>>, vector<1x128xf32>
    %5 = vector.broadcast %4 : vector<1x128xf32> to vector<256x128xf32>
    %6 = arith.addf %3, %5 : vector<256x128xf32>
    %cst_5 = arith.constant 0.000000e+00 : f32
    %7 = vector.broadcast %cst_5 : f32 to vector<256x128xf32>
    %8 = arith.maximumf %6, %7 : vector<256x128xf32>
    %c0_6 = arith.constant 0 : index
    %c0_7 = arith.constant 0 : index
    %9 = vector.load %arg4[%c0_6, %c0_7] : memref<8x128xbf16, #tpu.memory_space<vmem>>, vector<8x128xbf16>
    %10 = arith.truncf %8 : vector<256x128xf32> to vector<256x128xbf16>
    %cst_8 = arith.constant dense<0.000000e+00> : vector<8x256xf32>
    %11 = tpu.matmul %9, %10, %cst_8 {dimension_numbers = #tpu.dot_dimension_numbers<[1], [1], [0], [0], [0, 0, 1, 0], [], []>} : vector<8x128xbf16>, vector<256x128xbf16>, vector<8x256xf32> -> vector<8x256xf32>
    %cst_9 = arith.constant dense<0.000000e+00> : vector<256xf32>
    %12 = vector.multi_reduction <add>, %11, %cst_9 [0] : vector<8x256xf32> to vector<256xf32>
    %13 = vector.shape_cast %12 : vector<256xf32> to vector<1x256xf32>
    %c0_10 = arith.constant 0 : index
    %c0_11 = arith.constant 0 : index
    %14 = memref.load %arg5[%c0_10, %c0_11] : memref<1x1xf32, #tpu.memory_space<smem>>
    %15 = vector.broadcast %14 : f32 to vector<1x256xf32>
    %16 = arith.addf %13, %15 : vector<1x256xf32>
    %17 = arith.negf %16 : vector<1x256xf32>
    %18 = math.exp %17 : vector<1x256xf32>
    %cst_12 = arith.constant 1.000000e+00 : f32
    %19 = vector.broadcast %cst_12 : f32 to vector<1x256xf32>
    %20 = arith.addf %19, %18 : vector<1x256xf32>
    %21 = arith.divf %19, %20 : vector<1x256xf32>
    %c0_13 = arith.constant 0 : index
    %c0_14 = arith.constant 0 : index
    %22 = vector.load %arg6[%c0_13, %c0_14] : memref<1x256xf32, #tpu.memory_space<vmem>>, vector<1x256xf32>
    tpu.vector_store %arg6[%c0_13, %c0_14], %21 {strides = array<i32>} : memref<1x256xf32, #tpu.memory_space<vmem>>, vector<1x256xf32>,
    return
  }
  func.func @transform_0(%arg0: i32) -> (i32, i32) {
    %c0_i32 = arith.constant 0 : i32
    %c0_i32_0 = arith.constant 0 : i32
    return %arg0, %c0_i32 : i32, i32
  }
  func.func @transform_1(%arg0: i32) -> (i32, i32) {
    %c0_i32 = arith.constant 0 : i32
    %c0_i32_0 = arith.constant 0 : i32
    %c0_i32_1 = arith.constant 0 : i32
    return %c0_i32, %c0_i32_0 : i32, i32
  }
  func.func @transform_2(%arg0: i32) -> (i32, i32) {
    %c0_i32 = arith.constant 0 : i32
    %c0_i32_0 = arith.constant 0 : i32
    %c0_i32_1 = arith.constant 0 : i32
    return %c0_i32, %c0_i32_0 : i32, i32
  }
  func.func @transform_3(%arg0: i32) -> (i32, i32) {
    %c0_i32 = arith.constant 0 : i32
    %c0_i32_0 = arith.constant 0 : i32
    %c0_i32_1 = arith.constant 0 : i32
    return %c0_i32, %c0_i32_0 : i32, i32
  }
  func.func @transform_4(%arg0: i32) -> (i32, i32) {
    %c0_i32 = arith.constant 0 : i32
    %c0_i32_0 = arith.constant 0 : i32
    %c0_i32_1 = arith.constant 0 : i32
    return %c0_i32, %c0_i32_0 : i32, i32
  }
  func.func @transform_5(%arg0: i32) -> (i32, i32) {
    %c0_i32 = arith.constant 0 : i32
    %c0_i32_0 = arith.constant 0 : i32
    return %c0_i32, %arg0 : i32, i32
  }
}

</mosaic_0001>

<llo_original>
// kernel: tpu_custom_call.1
$region0: #{tpu_custom_call.1}
  #allocation0 [shape = 'u32[]', space=smem, size = 0x4, offset = 0x4, fixed_abs, tag = 'smem constant byte address 0x4 - core index']
  #allocation1 [shape = 'u32[144,128]{1,0:T(1,128)}', space=vmem, size = 0x12000, scoped, tag = 'internal scratch']
  #allocation2 [shape = 'f32[1,1]{1,0:T(1,128)S(6)}', space=smem, size = 0x200, scoped, tag = 'scoped memory for tpu_custom_call.1']
  %s0 = inlined_call_operand.hbm [shape: f32[512,256], index: 0, kind: input, shape index: {}]
  %s1 = inlined_call_operand.hbm [shape: bf16[256,128], index: 1, kind: input, shape index: {}]
  %s2 = inlined_call_operand.vmem [shape: f32[1,128], index: 2, kind: input, shape index: {}]
  %s3 = inlined_call_operand.vmem [shape: bf16[8,128], index: 3, kind: input, shape index: {}]
  %s4 = inlined_call_operand.<no memory space> [shape: f32[1,1], index: 4, kind: input, shape index: {}]
  %s5 = inlined_call_operand.hbm [shape: f32[1,512], index: 5, kind: output, shape index: {}]
  %s6 = sld [smem:[#allocation0]]
  $region61: #{tpu_custom_call.1} parent=0
    _
  %s8 = ssub.s32 1, %s6
  %s9 = scalar_select 0, %s8, %s6
  %10 = sst [smem:[#allocation2]] %s4
  $region1: #{tpu_custom_call.1} parent=0
    #allocation3 [shape = 'u8[524288]{0}', space=vmem, size = 0x80000, scoped, tag = 'input window, operand 0']
    #allocation4 [shape = 's32[2]{0}', space=sflag, size = 0x8, scoped, tag = 'scoped memory for tpu_custom_call.1']
    #allocation5 [shape = 's32[2]{0}', space=sflag, size = 0x8, scoped, tag = 'scoped memory for tpu_custom_call.1']
    #allocation6 [shape = 'u8[65536]{0}', space=vmem, size = 0x10000, scoped, tag = 'input window, operand 1, single buffered']
    #allocation7 [shape = 's32[1]{0}', space=sflag, size = 0x4, scoped, tag = 'scoped memory for tpu_custom_call.1']
    #allocation8 [shape = 'u8[2048]{0}', space=vmem, size = 0x800, scoped, tag = 'output window, operand 0']
    %11 = vsyncpa [#allocation4], 0
    %s12 = scalar_lea.sflag [#allocation4], 1
    %13 = vsyncpa %s12, 0
    %14 = vsyncpa [#allocation7], 0
    %15 = vsyncpa [#allocation5], 0
    %s16 = scalar_lea.sflag [#allocation5], 1
    %17 = vsyncpa %s16, 0
    loop: start=0, step=1, limit=4
    $region2: #{tpu_custom_call.1} parent=1 // loop_pre_header
      _
    $region3: #{tpu_custom_call.1} parent=1 // loop_header
      %s19 = sphi 0, %s23
      %p20 = scmp.ge.s32.totalorder %s19, 4
      %s29 = sphi 0, %s31
      %s32 = sphi 0, %s29
      %s33 = sphi 0, %s32
      %s49 = sphi 0, %s33
      %s53 = sphi 0, %s53
      %s55 = sphi 0, %s53
      %s56 = sphi 0, %s55
      %s70 = sphi 0, %s56
      %s74 = sphi 0, %s74
      %s76 = sphi 0, %s74
      %s77 = sphi 0, %s76
      %s91 = sphi 0, %s77
      %s95 = sphi 0, %s95
      %s97 = sphi 0, %s95
      %s98 = sphi 0, %s97
      %s112 = sphi 0, %s98
      %s116 = sphi 0, %s116
      %s118 = sphi 0, %s116
      %s119 = sphi 0, %s118
      %s133 = sphi 0, %s119
      %s139 = sphi 0, %s141
      %s142 = sphi 0, %s139
      %s143 = sphi 0, %s142
      %s159 = sphi 0, %s143
    $region4: #{tpu_custom_call.1} parent=1 // loop_header_branch
      %22 = sbr.rel (%p20) target = $region8
    $region5: #{tpu_custom_call.1} parent=1 // loop_body
      %s24 = ssub.s32 %s19, 1
      %s25 = ssub.s32 %s19, 2
      %s26 = sadd.s32 %s19, 1
      %s27 = ssub.s32 %s19, %s26
      %p28 = scmp.eq.s32.totalorder %s27, 0
      %s30 = sadd.s32 %s29, 1
      %s31 = scalar_select %p28, %s29, %s30
      %p34 = pneg %p28
      %p35 = scmp.eq.s32.totalorder %s19, 1
      %p36 = por %p34, %p35
      %p37 = scmp.ne.s32.totalorder %s29, %s32
      %p38 = scmp.eq.s32.totalorder %s19, 0
      %p39 = por %p37, %p38
      %p40 = scmp.ne.s32.totalorder %s29, %s32
      %p41 = scmp.eq.s32.totalorder %s24, 1
      %p42 = por %p40, %p41
      %p43 = scmp.ne.s32.totalorder %s32, %s33
      %p44 = scmp.eq.s32.totalorder %s24, 0
      %p45 = por %p43, %p44
      %p46 = scmp.ne.s32.totalorder %s32, %s33
      %p47 = scmp.eq.s32.totalorder %s25, 1
      %p48 = por %p46, %p47
      %p50 = scmp.ne.s32.totalorder %s33, %s49
      %p51 = scmp.eq.s32.totalorder %s25, 0
      %p52 = por %p50, %p51
      %s54 = sadd.s32 %s53, 1
      %p57 = scmp.eq.s32.totalorder %s19, 1
      %p58 = scmp.ne.s32.totalorder %s53, %s55
      %p59 = scmp.eq.s32.totalorder %s19, 0
      %p60 = por %p58, %p59
      %p61 = scmp.ne.s32.totalorder %s53, %s55
      %p62 = scmp.eq.s32.totalorder %s24, 1
      %p63 = por %p61, %p62
      %p64 = scmp.ne.s32.totalorder %s55, %s56
      %p65 = scmp.eq.s32.totalorder %s24, 0
      %p66 = por %p64, %p65
      %p67 = scmp.ne.s32.totalorder %s55, %s56
      %p68 = scmp.eq.s32.totalorder %s25, 1
      %p69 = por %p67, %p68
      %p71 = scmp.ne.s32.totalorder %s56, %s70
      %p72 = scmp.eq.s32.totalorder %s25, 0
      %p73 = por %p71, %p72
      %s75 = sadd.s32 %s74, 1
      %p78 = scmp.eq.s32.totalorder %s19, 1
      %p79 = scmp.ne.s32.totalorder %s74, %s76
      %p80 = scmp.eq.s32.totalorder %s19, 0
      %p81 = por %p79, %p80
      %p82 = scmp.ne.s32.totalorder %s74, %s76
      %p83 = scmp.eq.s32.totalorder %s24, 1
      %p84 = por %p82, %p83
      %p85 = scmp.ne.s32.totalorder %s76, %s77
      %p86 = scmp.eq.s32.totalorder %s24, 0
      %p87 = por %p85, %p86
      %p88 = scmp.ne.s32.totalorder %s76, %s77
      %p89 = scmp.eq.s32.totalorder %s25, 1
      %p90 = por %p88, %p89
      %p92 = scmp.ne.s32.totalorder %s77, %s91
      %p93 = scmp.eq.s32.totalorder %s25, 0
      %p94 = por %p92, %p93
      %s96 = sadd.s32 %s95, 1
      %p99 = scmp.eq.s32.totalorder %s19, 1
      %p100 = scmp.ne.s32.totalorder %s95, %s97
      %p101 = scmp.eq.s32.totalorder %s19, 0
      %p102 = por %p100, %p101
      %p103 = scmp.ne.s32.totalorder %s95, %s97
      %p104 = scmp.eq.s32.totalorder %s24, 1
      %p105 = por %p103, %p104
      %p106 = scmp.ne.s32.totalorder %s97, %s98
      %p107 = scmp.eq.s32.totalorder %s24, 0
      %p108 = por %p106, %p107
      %p109 = scmp.ne.s32.totalorder %s97, %s98
      %p110 = scmp.eq.s32.totalorder %s25, 1
      %p111 = por %p109, %p110
      %p113 = scmp.ne.s32.totalorder %s98, %s112
      %p114 = scmp.eq.s32.totalorder %s25, 0
      %p115 = por %p113, %p114
      %s117 = sadd.s32 %s116, 1
      %p120 = scmp.eq.s32.totalorder %s19, 1
      %p121 = scmp.ne.s32.totalorder %s116, %s118
      %p122 = scmp.eq.s32.totalorder %s19, 0
      %p123 = por %p121, %p122
      %p124 = scmp.ne.s32.totalorder %s116, %s118
      %p125 = scmp.eq.s32.totalorder %s24, 1
      %p126 = por %p124, %p125
      %p127 = scmp.ne.s32.totalorder %s118, %s119
      %p128 = scmp.eq.s32.totalorder %s24, 0
      %p129 = por %p127, %p128
      %p130 = scmp.ne.s32.totalorder %s118, %s119
      %p131 = scmp.eq.s32.totalorder %s25, 1
      %p132 = por %p130, %p131
      %p134 = scmp.ne.s32.totalorder %s119, %s133
      %p135 = scmp.eq.s32.totalorder %s25, 0
      %p136 = por %p134, %p135
      %s137 = ssub.s32 %s19, %s26
      %p138 = scmp.eq.s32.totalorder %s137, 0
      %s140 = sadd.s32 %s139, 1
      %s141 = scalar_select %p138, %s139, %s140
      %p144 = pneg %p138
      %p145 = scmp.eq.s32.totalorder %s19, 1
      %p146 = por %p144, %p145
      %p147 = scmp.ne.s32.totalorder %s139, %s142
      %p148 = scmp.eq.s32.totalorder %s19, 0
      %p149 = por %p147, %p148
      %p150 = scmp.ne.s32.totalorder %s139, %s142
      %p151 = scmp.eq.s32.totalorder %s24, 1
      %p152 = por %p150, %p151
      %p153 = scmp.ne.s32.totalorder %s142, %s143
      %p154 = scmp.eq.s32.totalorder %s24, 0
      %p155 = por %p153, %p154
      %p156 = scmp.ne.s32.totalorder %s142, %s143
      %p157 = scmp.eq.s32.totalorder %s25, 1
      %p158 = por %p156, %p157
      %p160 = scmp.ne.s32.totalorder %s143, %s159
      %p161 = scmp.eq.s32.totalorder %s25, 0
      %p162 = por %p160, %p161
      %p163 = scmp.le.s32.totalorder 1, %s19
      %p164 = scmp.lt.s32.totalorder %s19, 3
      %p165 = pnand %p163, %p164
      %p166 = pneg %p165
      // Predicated region
      $region9: #{tpu_custom_call.1} parent=5 // pred_check
        _
      $region10: #{tpu_custom_call.1} parent=5 // pred_check_branch
        %168 = sbr.rel (%p165) target = $region12
      $region11: #{tpu_custom_call.1} parent=5 // pred_region
        %s169 = ssub.s32 %s19, 1
        // Predicated region
        $region13: #{tpu_custom_call.1} parent=11 // pred_check
          %p170 = pneg %p66
        $region14: #{tpu_custom_call.1} parent=11 // pred_check_branch
          %172 = sbr.rel (%p170) target = $region16
        $region15: #{tpu_custom_call.1} parent=11 // pred_region
          %s174 = ssub.s32 2048, 2048
          %175 = vsyncadd [#allocation7], %s174
          %s176 = sshll.u32 [#allocation6], 4
          %s177 = int_to_ptr.vmem [resolvable:$true] %s176
          %182 = dma.hbm_to_vmem [thread:$0]  %s1, 2048, %s177, [#allocation7], 64, 64, 4
        $region16: #{tpu_custom_call.1} parent=11 // pred_fallthru
          _
        // Predicated region
        $region17: #{tpu_custom_call.1} parent=11 // pred_check
          %p183 = pneg %p87
        $region18: #{tpu_custom_call.1} parent=11 // pred_check_branch
          %185 = sbr.rel (%p183) target = $region20
        $region19: #{tpu_custom_call.1} parent=11 // pred_region
          _
        $region20: #{tpu_custom_call.1} parent=11 // pred_fallthru
          _
        // Predicated region
        $region21: #{tpu_custom_call.1} parent=11 // pred_check
          %p186 = pneg %p108
        $region22: #{tpu_custom_call.1} parent=11 // pred_check_branch
          %188 = sbr.rel (%p186) target = $region24
        $region23: #{tpu_custom_call.1} parent=11 // pred_region
          _
        $region24: #{tpu_custom_call.1} parent=11 // pred_fallthru
          _
        // Predicated region
        $region25: #{tpu_custom_call.1} parent=11 // pred_check
          %p189 = pneg %p129
        $region26: #{tpu_custom_call.1} parent=11 // pred_check_branch
          %191 = sbr.rel (%p189) target = $region28
        $region27: #{tpu_custom_call.1} parent=11 // pred_region
          _
        $region28: #{tpu_custom_call.1} parent=11 // pred_fallthru
          _
      $region12: #{tpu_custom_call.1} parent=5 // pred_fallthru
        _
      %p192 = scmp.lt.s32.totalorder %s19, 2
      // Predicated region
      $region29: #{tpu_custom_call.1} parent=5 // pred_check
        %p193 = pneg %p192
      $region30: #{tpu_custom_call.1} parent=5 // pred_check_branch
        %195 = sbr.rel (%p193) target = $region32
      $region31: #{tpu_custom_call.1} parent=5 // pred_region
        // Predicated region
        $region33: #{tpu_custom_call.1} parent=31 // pred_check
          %p196 = pneg %p39
        $region34: #{tpu_custom_call.1} parent=31 // pred_check_branch
          %198 = sbr.rel (%p196) target = $region36
        $region35: #{tpu_custom_call.1} parent=31 // pred_region
          %s199 = sand.u32 %s29, 1
          %s200 = scalar_lea.sflag [#allocation4], %s199
          %s201 = sand.u32 %s29, 1
          %s202 = smul.addr %s201, 512
          %s203 = scalar_lea.vmem [#allocation3], %s202
          %s204 = smul.u32 32, %s19
          %s206 = ssub.s32 8192, 8192
          %207 = vsyncadd %s200, %s206
          %s208 = smul.addr %s204, 2
          %s209 = smul.addr %s208, 128
          %s210 = scalar_lea.hbm %s0, %s209
          %s211 = sshll.u32 %s203, 4
          %s212 = int_to_ptr.vmem [resolvable:$true] %s211
          %217 = dma.hbm_to_vmem [thread:$0]  %s210, 8192, %s212, %s200, 256, 256, 16
        $region36: #{tpu_custom_call.1} parent=31 // pred_fallthru
          _
      $region32: #{tpu_custom_call.1} parent=5 // pred_fallthru
        _
      %p218 = scmp.le.s32.totalorder 1, %s19
      %p219 = scmp.lt.s32.totalorder %s19, 3
      %p220 = pnand %p218, %p219
      %p221 = pneg %p220
      // Predicated region
      $region37: #{tpu_custom_call.1} parent=5 // pred_check
        _
      $region38: #{tpu_custom_call.1} parent=5 // pred_check_branch
        %223 = sbr.rel (%p220) target = $region40
      $region39: #{tpu_custom_call.1} parent=5 // pred_region
        %s224 = ssub.s32 %s19, 1
        %s225 = sand.u32 %s32, 1
        %s226 = scalar_lea.sflag [#allocation4], %s225
        %s227 = sand.u32 %s32, 1
        %s228 = smul.addr %s227, 512
        %s229 = scalar_lea.vmem [#allocation3], %s228
        // Predicated region
        $region41: #{tpu_custom_call.1} parent=39 // pred_check
          %p230 = pneg %p45
        $region42: #{tpu_custom_call.1} parent=39 // pred_check_branch
          %232 = sbr.rel (%p230) target = $region44
        $region43: #{tpu_custom_call.1} parent=39 // pred_region
          %233 = dma.done %s226, 8192
        $region44: #{tpu_custom_call.1} parent=39 // pred_fallthru
          _
        // Predicated region
        $region45: #{tpu_custom_call.1} parent=39 // pred_check
          %p234 = pneg %p66
        $region46: #{tpu_custom_call.1} parent=39 // pred_check_branch
          %236 = sbr.rel (%p234) target = $region48
        $region47: #{tpu_custom_call.1} parent=39 // pred_region
          %237 = dma.done [#allocation7], 2048
        $region48: #{tpu_custom_call.1} parent=39 // pred_fallthru
          _
        %s238 = sand.u32 %s32, 1
        %s239 = scalar_lea.sflag [#allocation4], %s238
        %s240 = sand.u32 %s32, 1
        %s241 = smul.addr %s240, 512
        %s242 = scalar_lea.vmem [#allocation3], %s241
        %p243 = pneg %p45
        %p244 = pneg %p42
        %p245 = pneg %p66
        %p246 = pneg %p63
        %p247 = pneg %p87
        %p248 = pneg %p84
        %p249 = pneg %p108
        %p250 = pneg %p105
        %p251 = pneg %p129
        %p252 = pneg %p126
        %p253 = pneg %p155
        %p254 = pneg %p152
        %s255 = sand.u32 %s142, 1
        %s256 = scalar_lea.sflag [#allocation5], %s255
        %s257 = sand.u32 %s142, 1
        %s258 = smul.addr %s257, 2
        %s259 = scalar_lea.vmem [#allocation8], %s258
        %s260 = smul.u32 32, %s24
        %s261 = smul.u32 2, %s24
        %v263 = vld [vmem:[%s229] sm:$0xff]
        %v264 = vld [vmem:[%s229 + $0x8] sm:$0xff]
        %v265 = vld [vmem:[%s229 + $0x10] sm:$0xff]
        %v266 = vld [vmem:[%s229 + $0x18] sm:$0xff]
        %v267 = vld [vmem:[%s229 + $0x20] sm:$0xff]
        %v268 = vld [vmem:[%s229 + $0x28] sm:$0xff]
        %v269 = vld [vmem:[%s229 + $0x30] sm:$0xff]
        %v270 = vld [vmem:[%s229 + $0x38] sm:$0xff]
        %v271 = vld [vmem:[%s229 + $0x40] sm:$0xff]
        %v272 = vld [vmem:[%s229 + $0x48] sm:$0xff]
        %v273 = vld [vmem:[%s229 + $0x50] sm:$0xff]
        %v274 = vld [vmem:[%s229 + $0x58] sm:$0xff]
        %v275 = vld [vmem:[%s229 + $0x60] sm:$0xff]
        %v276 = vld [vmem:[%s229 + $0x68] sm:$0xff]
        %v277 = vld [vmem:[%s229 + $0x70] sm:$0xff]
        %v278 = vld [vmem:[%s229 + $0x78] sm:$0xff]
        %v279 = vld [vmem:[%s229 + $0x80] sm:$0xff]
        %v280 = vld [vmem:[%s229 + $0x88] sm:$0xff]
        %v281 = vld [vmem:[%s229 + $0x90] sm:$0xff]
        %v282 = vld [vmem:[%s229 + $0x98] sm:$0xff]
        %v283 = vld [vmem:[%s229 + $0xa0] sm:$0xff]
        %v284 = vld [vmem:[%s229 + $0xa8] sm:$0xff]
        %v285 = vld [vmem:[%s229 + $0xb0] sm:$0xff]
        %v286 = vld [vmem:[%s229 + $0xb8] sm:$0xff]
        %v287 = vld [vmem:[%s229 + $0xc0] sm:$0xff]
        %v288 = vld [vmem:[%s229 + $0xc8] sm:$0xff]
        %v289 = vld [vmem:[%s229 + $0xd0] sm:$0xff]
        %v290 = vld [vmem:[%s229 + $0xd8] sm:$0xff]
        %v291 = vld [vmem:[%s229 + $0xe0] sm:$0xff]
        %v292 = vld [vmem:[%s229 + $0xe8] sm:$0xff]
        %v293 = vld [vmem:[%s229 + $0xf0] sm:$0xff]
        %v294 = vld [vmem:[%s229 + $0xf8] sm:$0xff]
        %v295 = vld [vmem:[%s229 + $0x100] sm:$0xff]
        %v296 = vld [vmem:[%s229 + $0x108] sm:$0xff]
        %v297 = vld [vmem:[%s229 + $0x110] sm:$0xff]
        %v298 = vld [vmem:[%s229 + $0x118] sm:$0xff]
        %v299 = vld [vmem:[%s229 + $0x120] sm:$0xff]
        %v300 = vld [vmem:[%s229 + $0x128] sm:$0xff]
        %v301 = vld [vmem:[%s229 + $0x130] sm:$0xff]
        %v302 = vld [vmem:[%s229 + $0x138] sm:$0xff]
        %v303 = vld [vmem:[%s229 + $0x140] sm:$0xff]
        %v304 = vld [vmem:[%s229 + $0x148] sm:$0xff]
        %v305 = vld [vmem:[%s229 + $0x150] sm:$0xff]
        %v306 = vld [vmem:[%s229 + $0x158] sm:$0xff]
        %v307 = vld [vmem:[%s229 + $0x160] sm:$0xff]
        %v308 = vld [vmem:[%s229 + $0x168] sm:$0xff]
        %v309 = vld [vmem:[%s229 + $0x170] sm:$0xff]
        %v310 = vld [vmem:[%s229 + $0x178] sm:$0xff]
        %v311 = vld [vmem:[%s229 + $0x180] sm:$0xff]
        %v312 = vld [vmem:[%s229 + $0x188] sm:$0xff]
        %v313 = vld [vmem:[%s229 + $0x190] sm:$0xff]
        %v314 = vld [vmem:[%s229 + $0x198] sm:$0xff]
        %v315 = vld [vmem:[%s229 + $0x1a0] sm:$0xff]
        %v316 = vld [vmem:[%s229 + $0x1a8] sm:$0xff]
        %v317 = vld [vmem:[%s229 + $0x1b0] sm:$0xff]
        %v318 = vld [vmem:[%s229 + $0x1b8] sm:$0xff]
        %v319 = vld [vmem:[%s229 + $0x1c0] sm:$0xff]
        %v320 = vld [vmem:[%s229 + $0x1c8] sm:$0xff]
        %v321 = vld [vmem:[%s229 + $0x1d0] sm:$0xff]
        %v322 = vld [vmem:[%s229 + $0x1d8] sm:$0xff]
        %v323 = vld [vmem:[%s229 + $0x1e0] sm:$0xff]
        %v324 = vld [vmem:[%s229 + $0x1e8] sm:$0xff]
        %v325 = vld [vmem:[%s229 + $0x1f0] sm:$0xff]
        %v326 = vld [vmem:[%s229 + $0x1f8] sm:$0xff]
        %v327 = vpack.c.bf16 %v265, %v263
        %v328 = vpack.c.bf16 %v266, %v264
        %v329 = vpack.c.bf16 %v269, %v267
        %v330 = vpack.c.bf16 %v270, %v268
        %v331 = vpack.c.bf16 %v273, %v271
        %v332 = vpack.c.bf16 %v274, %v272
        %v333 = vpack.c.bf16 %v277, %v275
        %v334 = vpack.c.bf16 %v278, %v276
        %v335 = vpack.c.bf16 %v281, %v279
        %v336 = vpack.c.bf16 %v282, %v280
        %v337 = vpack.c.bf16 %v285, %v283
        %v338 = vpack.c.bf16 %v286, %v284
        %v339 = vpack.c.bf16 %v289, %v287
        %v340 = vpack.c.bf16 %v290, %v288
        %v341 = vpack.c.bf16 %v293, %v291
        %v342 = vpack.c.bf16 %v294, %v292
        %v343 = vpack.c.bf16 %v297, %v295
        %v344 = vpack.c.bf16 %v298, %v296
        %v345 = vpack.c.bf16 %v301, %v299
        %v346 = vpack.c.bf16 %v302, %v300
        %v347 = vpack.c.bf16 %v305, %v303
        %v348 = vpack.c.bf16 %v306, %v304
        %v349 = vpack.c.bf16 %v309, %v307
        %v350 = vpack.c.bf16 %v310, %v308
        %v351 = vpack.c.bf16 %v313, %v311
        %v352 = vpack.c.bf16 %v314, %v312
        %v353 = vpack.c.bf16 %v317, %v315
        %v354 = vpack.c.bf16 %v318, %v316
        %v355 = vpack.c.bf16 %v321, %v319
        %v356 = vpack.c.bf16 %v322, %v320
        %v357 = vpack.c.bf16 %v325, %v323
        %v358 = vpack.c.bf16 %v326, %v324
        %v359 = vld [vmem:[#allocation6] sm:$0xf]
        %v360 = vld [vmem:[#allocation6 + $0x4] sm:$0xf]
        %v361 = vld [vmem:[#allocation6 + $0x8] sm:$0xf]
        %v362 = vld [vmem:[#allocation6 + $0xc] sm:$0xf]
        %v363 = vld [vmem:[#allocation6 + $0x10] sm:$0xf]
        %v364 = vld [vmem:[#allocation6 + $0x14] sm:$0xf]
        %v365 = vld [vmem:[#allocation6 + $0x18] sm:$0xf]
        %v366 = vld [vmem:[#allocation6 + $0x1c] sm:$0xf]
        %v367 = vld [vmem:[#allocation6 + $0x20] sm:$0xf]
        %v368 = vld [vmem:[#allocation6 + $0x24] sm:$0xf]
        %v369 = vld [vmem:[#allocation6 + $0x28] sm:$0xf]
        %v370 = vld [vmem:[#allocation6 + $0x2c] sm:$0xf]
        %v371 = vld [vmem:[#allocation6 + $0x30] sm:$0xf]
        %v372 = vld [vmem:[#allocation6 + $0x34] sm:$0xf]
        %v373 = vld [vmem:[#allocation6 + $0x38] sm:$0xf]
        %v374 = vld [vmem:[#allocation6 + $0x3c] sm:$0xf]
        %v375 = vld [vmem:[#allocation6 + $0x40] sm:$0xf]
        %v376 = vld [vmem:[#allocation6 + $0x44] sm:$0xf]
        %v377 = vld [vmem:[#allocation6 + $0x48] sm:$0xf]
        %v378 = vld [vmem:[#allocation6 + $0x4c] sm:$0xf]
        %v379 = vld [vmem:[#allocation6 + $0x50] sm:$0xf]
        %v380 = vld [vmem:[#allocation6 + $0x54] sm:$0xf]
        %v381 = vld [vmem:[#allocation6 + $0x58] sm:$0xf]
        %v382 = vld [vmem:[#allocation6 + $0x5c] sm:$0xf]
        %v383 = vld [vmem:[#allocation6 + $0x60] sm:$0xf]
        %v384 = vld [vmem:[#allocation6 + $0x64] sm:$0xf]
        %v385 = vld [vmem:[#allocation6 + $0x68] sm:$0xf]
        %v386 = vld [vmem:[#allocation6 + $0x6c] sm:$0xf]
        %v387 = vld [vmem:[#allocation6 + $0x70] sm:$0xf]
        %v388 = vld [vmem:[#allocation6 + $0x74] sm:$0xf]
        %v389 = vld [vmem:[#allocation6 + $0x78] sm:$0xf]
        %v390 = vld [vmem:[#allocation6 + $0x7c] sm:$0xf]
        %v391 = vld [vmem:[%s2] sm:$0x1]
        %v393 = vlaneseq
        %v394 = vshrl.u32 %v393, 7
        %v395 = vsub.s32 0, %v394
        %v396 = vrot.slane %v391, %v395
        %v430 = vunpack.c.l.b16 %v359
        %v431 = vunpack.c.l.b16 %v360
        %v432 = vunpack.c.l.b16 %v361
        %v433 = vunpack.c.l.b16 %v362
        %v434 = vunpack.c.l.b16 %v363
        %v435 = vunpack.c.l.b16 %v364
        %v436 = vunpack.c.l.b16 %v365
        %v437 = vunpack.c.l.b16 %v366
        %v438 = vunpack.c.l.b16 %v367
        %v439 = vunpack.c.l.b16 %v368
        %v440 = vunpack.c.l.b16 %v369
        %v441 = vunpack.c.l.b16 %v370
        %v442 = vunpack.c.l.b16 %v371
        %v443 = vunpack.c.l.b16 %v372
        %v444 = vunpack.c.l.b16 %v373
        %v445 = vunpack.c.l.b16 %v374
        %v446 = vunpack.c.l.b16 %v375
        %v447 = vunpack.c.l.b16 %v376
        %v448 = vunpack.c.l.b16 %v377
        %v449 = vunpack.c.l.b16 %v378
        %v450 = vunpack.c.l.b16 %v379
        %v451 = vunpack.c.l.b16 %v380
        %v452 = vunpack.c.l.b16 %v381
        %v453 = vunpack.c.l.b16 %v382
        %v454 = vunpack.c.l.b16 %v383
        %v455 = vunpack.c.l.b16 %v384
        %v456 = vunpack.c.l.b16 %v385
        %v457 = vunpack.c.l.b16 %v386
        %v458 = vunpack.c.l.b16 %v387
        %v459 = vunpack.c.l.b16 %v388
        %v460 = vunpack.c.l.b16 %v389
        %v461 = vunpack.c.l.b16 %v390
        %v462 = vpack.c.b16 %v431, %v430
        %v463 = vpack.c.b16 %v433, %v432
        %v464 = vpack.c.b16 %v435, %v434
        %v465 = vpack.c.b16 %v437, %v436
        %v466 = vpack.c.b16 %v439, %v438
        %v467 = vpack.c.b16 %v441, %v440
        %v468 = vpack.c.b16 %v443, %v442
        %v469 = vpack.c.b16 %v445, %v444
        %v470 = vpack.c.b16 %v447, %v446
        %v471 = vpack.c.b16 %v449, %v448
        %v472 = vpack.c.b16 %v451, %v450
        %v473 = vpack.c.b16 %v453, %v452
        %v474 = vpack.c.b16 %v455, %v454
        %v475 = vpack.c.b16 %v457, %v456
        %v476 = vpack.c.b16 %v459, %v458
        %v477 = vpack.c.b16 %v461, %v460
        %494 = vmatprep.subr.bf16.mxu0 0
        %495 = vmatpush1.bf16.msra.mxu0 %v469
        %496 = vmatprep.subr.bf16.mxu0 0
        %497 = vmatpush1.bf16.msra.mxu0 %v468
        %498 = vmatprep.subr.bf16.mxu0 0
        %499 = vmatpush1.bf16.msra.mxu0 %v467
        %500 = vmatprep.subr.bf16.mxu0 0
        %501 = vmatpush1.bf16.msra.mxu0 %v466
        %502 = vmatprep.subr.bf16.mxu0 0
        %503 = vmatpush1.bf16.msra.mxu0 %v465
        %504 = vmatprep.subr.bf16.mxu0 0
        %505 = vmatpush1.bf16.msra.mxu0 %v464
        %506 = vmatprep.subr.bf16.mxu0 0
        %507 = vmatpush1.bf16.msra.mxu0 %v463
        %508 = vmatprep.subr.bf16.mxu0 0
        %509 = vmatpush1.bf16.msra.mxu0 %v462
        %510 = vmatprep.subr.bf16.mxu0 0
        %511 = vmatpush2.bf16.msra.mxu0 %v477
        %512 = vmatprep.subr.bf16.mxu0 0
        %513 = vmatpush2.bf16.msra.mxu0 %v476
        %514 = vmatprep.subr.bf16.mxu0 0
        %515 = vmatpush2.bf16.msra.mxu0 %v475
        %516 = vmatprep.subr.bf16.mxu0 0
        %517 = vmatpush2.bf16.msra.mxu0 %v474
        %518 = vmatprep.subr.bf16.mxu0 0
        %519 = vmatpush2.bf16.msra.mxu0 %v473
        %520 = vmatprep.subr.bf16.mxu0 0
        %521 = vmatpush2.bf16.msra.mxu0 %v472
        %522 = vmatprep.subr.bf16.mxu0 0
        %523 = vmatpush2.bf16.msra.mxu0 %v471
        %524 = vmatprep.subr.bf16.mxu0 0
        %525 = vmatpush2.bf16.msra.mxu0 %v470
        %526 = vmatprep.mubr.bf16.mxu0 %v328
        %527 = vmatmul.mubr.bf16.gmra.mxu0 %v327
        %v528 = vpop.f32.mrf.mxu0
        %v529 = vadd.f32 %v396, %v528
        %v530 = vpop.f32.mrf.mxu0
        %v531 = vpop.f32.mrf.mxu0
        %v532 = vadd.f32 %v396, %v531
        %v533 = vpop.f32.mrf.mxu0
        %534 = vmatprep.mubr.bf16.mxu0 %v330
        %535 = vmatmul.mubr.bf16.gmra.mxu0 %v329
        %v536 = vpop.f32.mrf.mxu0
        %v537 = vadd.f32 %v396, %v536
        %v538 = vpop.f32.mrf.mxu0
        %v539 = vpop.f32.mrf.mxu0
        %v540 = vadd.f32 %v396, %v539
        %v541 = vpop.f32.mrf.mxu0
        %542 = vmatprep.mubr.bf16.mxu0 %v332
        %543 = vmatmul.mubr.bf16.gmra.mxu0 %v331
        %v544 = vpop.f32.mrf.mxu0
        %v545 = vadd.f32 %v396, %v544
        %v546 = vpop.f32.mrf.mxu0
        %v547 = vpop.f32.mrf.mxu0
        %v548 = vadd.f32 %v396, %v547
        %v549 = vpop.f32.mrf.mxu0
        %550 = vmatprep.mubr.bf16.mxu0 %v334
        %551 = vmatmul.mubr.bf16.gmra.mxu0 %v333
        %v552 = vpop.f32.mrf.mxu0
        %v553 = vadd.f32 %v396, %v552
        %v554 = vpop.f32.mrf.mxu0
        %v555 = vpop.f32.mrf.mxu0
        %v556 = vadd.f32 %v396, %v555
        %v557 = vpop.f32.mrf.mxu0
        %558 = vmatprep.mubr.bf16.mxu0 %v336
        %559 = vmatmul.mubr.bf16.gmra.mxu0 %v335
        %v560 = vpop.f32.mrf.mxu0
        %v561 = vadd.f32 %v396, %v560
        %v562 = vpop.f32.mrf.mxu0
        %v563 = vpop.f32.mrf.mxu0
        %v564 = vadd.f32 %v396, %v563
        %v565 = vpop.f32.mrf.mxu0
        %566 = vmatprep.mubr.bf16.mxu0 %v338
        %567 = vmatmul.mubr.bf16.gmra.mxu0 %v337
        %v568 = vpop.f32.mrf.mxu0
        %v569 = vadd.f32 %v396, %v568
        %v570 = vpop.f32.mrf.mxu0
        %v571 = vpop.f32.mrf.mxu0
        %v572 = vadd.f32 %v396, %v571
        %v573 = vpop.f32.mrf.mxu0
        %574 = vmatprep.mubr.bf16.mxu0 %v340
        %575 = vmatmul.mubr.bf16.gmra.mxu0 %v339
        %v576 = vpop.f32.mrf.mxu0
        %v577 = vadd.f32 %v396, %v576
        %v578 = vpop.f32.mrf.mxu0
        %v579 = vpop.f32.mrf.mxu0
        %v580 = vadd.f32 %v396, %v579
        %v581 = vpop.f32.mrf.mxu0
        %582 = vmatprep.mubr.bf16.mxu0 %v342
        %583 = vmatmul.mubr.bf16.gmra.mxu0 %v341
        %v584 = vpop.f32.mrf.mxu0
        %v585 = vadd.f32 %v396, %v584
        %v586 = vpop.f32.mrf.mxu0
        %v587 = vpop.f32.mrf.mxu0
        %v588 = vadd.f32 %v396, %v587
        %v589 = vpop.f32.mrf.mxu0
        %590 = vmatprep.mubr.bf16.mxu0 %v344
        %591 = vmatmul.mubr.bf16.gmra.mxu0 %v343
        %v592 = vpop.f32.mrf.mxu0
        %v593 = vadd.f32 %v396, %v592
        %v594 = vpop.f32.mrf.mxu0
        %v595 = vpop.f32.mrf.mxu0
        %v596 = vadd.f32 %v396, %v595
        %v597 = vpop.f32.mrf.mxu0
        %598 = vmatprep.mubr.bf16.mxu0 %v346
        %599 = vmatmul.mubr.bf16.gmra.mxu0 %v345
        %v600 = vpop.f32.mrf.mxu0
        %v601 = vadd.f32 %v396, %v600
        %v602 = vpop.f32.mrf.mxu0
        %v603 = vpop.f32.mrf.mxu0
        %v604 = vadd.f32 %v396, %v603
        %v605 = vpop.f32.mrf.mxu0
        %606 = vmatprep.mubr.bf16.mxu0 %v348
        %607 = vmatmul.mubr.bf16.gmra.mxu0 %v347
        %v608 = vpop.f32.mrf.mxu0
        %v609 = vadd.f32 %v396, %v608
        %v610 = vpop.f32.mrf.mxu0
        %v611 = vpop.f32.mrf.mxu0
        %v612 = vadd.f32 %v396, %v611
        %v613 = vpop.f32.mrf.mxu0
        %614 = vmatprep.mubr.bf16.mxu0 %v350
        %615 = vmatmul.mubr.bf16.gmra.mxu0 %v349
        %v616 = vpop.f32.mrf.mxu0
        %v617 = vadd.f32 %v396, %v616
        %v618 = vpop.f32.mrf.mxu0
        %v619 = vpop.f32.mrf.mxu0
        %v620 = vadd.f32 %v396, %v619
        %v621 = vpop.f32.mrf.mxu0
        %622 = vmatprep.mubr.bf16.mxu0 %v352
        %623 = vmatmul.mubr.bf16.gmra.mxu0 %v351
        %v624 = vpop.f32.mrf.mxu0
        %v625 = vadd.f32 %v396, %v624
        %v626 = vpop.f32.mrf.mxu0
        %v627 = vpop.f32.mrf.mxu0
        %v628 = vadd.f32 %v396, %v627
        %v629 = vpop.f32.mrf.mxu0
        %630 = vmatprep.mubr.bf16.mxu0 %v354
        %631 = vmatmul.mubr.bf16.gmra.mxu0 %v353
        %v632 = vpop.f32.mrf.mxu0
        %v633 = vadd.f32 %v396, %v632
        %v634 = vpop.f32.mrf.mxu0
        %v635 = vpop.f32.mrf.mxu0
        %v636 = vadd.f32 %v396, %v635
        %v637 = vpop.f32.mrf.mxu0
        %638 = vmatprep.mubr.bf16.mxu0 %v356
        %639 = vmatmul.mubr.bf16.gmra.mxu0 %v355
        %v640 = vpop.f32.mrf.mxu0
        %v641 = vadd.f32 %v396, %v640
        %v642 = vpop.f32.mrf.mxu0
        %v643 = vpop.f32.mrf.mxu0
        %v644 = vadd.f32 %v396, %v643
        %v645 = vpop.f32.mrf.mxu0
        %646 = vmatprep.mubr.bf16.mxu0 %v358
        %647 = vmatmul.mubr.bf16.gmra.mxu0 %v357
        %v648 = vpop.f32.mrf.mxu0
        %v649 = vadd.f32 %v396, %v648
        %v650 = vpop.f32.mrf.mxu0
        %v651 = vpop.f32.mrf.mxu0
        %v652 = vadd.f32 %v396, %v651
        %v653 = vpop.f32.mrf.mxu0
        %654 = vdwg.mxu0
        %v655 = vmax.f32 %v529, 0.0
        %v656 = vmax.f32 %v532, 0.0
        %v657 = vmax.f32 %v537, 0.0
        %v658 = vmax.f32 %v540, 0.0
        %v659 = vmax.f32 %v545, 0.0
        %v660 = vmax.f32 %v548, 0.0
        %v661 = vmax.f32 %v553, 0.0
        %v662 = vmax.f32 %v556, 0.0
        %v663 = vmax.f32 %v561, 0.0
        %v664 = vmax.f32 %v564, 0.0
        %v665 = vmax.f32 %v569, 0.0
        %v666 = vmax.f32 %v572, 0.0
        %v667 = vmax.f32 %v577, 0.0
        %v668 = vmax.f32 %v580, 0.0
        %v669 = vmax.f32 %v585, 0.0
        %v670 = vmax.f32 %v588, 0.0
        %v671 = vmax.f32 %v593, 0.0
        %v672 = vmax.f32 %v596, 0.0
        %v673 = vmax.f32 %v601, 0.0
        %v674 = vmax.f32 %v604, 0.0
        %v675 = vmax.f32 %v609, 0.0
        %v676 = vmax.f32 %v612, 0.0
        %v677 = vmax.f32 %v617, 0.0
        %v678 = vmax.f32 %v620, 0.0
        %v679 = vmax.f32 %v625, 0.0
        %v680 = vmax.f32 %v628, 0.0
        %v681 = vmax.f32 %v633, 0.0
        %v682 = vmax.f32 %v636, 0.0
        %v683 = vmax.f32 %v641, 0.0
        %v684 = vmax.f32 %v644, 0.0
        %v685 = vmax.f32 %v649, 0.0
        %v686 = vmax.f32 %v652, 0.0
        %v687 = vld [vmem:[%s3] sm:$0xf]
        %v688 = vpack.c.bf16 %v656, %v655
        %v689 = vpack.c.bf16 %v658, %v657
        %v690 = vpack.c.bf16 %v660, %v659
        %v691 = vpack.c.bf16 %v662, %v661
        %v692 = vpack.c.bf16 %v664, %v663
        %v693 = vpack.c.bf16 %v666, %v665
        %v694 = vpack.c.bf16 %v668, %v667
        %v695 = vpack.c.bf16 %v670, %v669
        %v696 = vpack.c.bf16 %v672, %v671
        %v697 = vpack.c.bf16 %v674, %v673
        %v698 = vpack.c.bf16 %v676, %v675
        %v699 = vpack.c.bf16 %v678, %v677
        %v700 = vpack.c.bf16 %v680, %v679
        %v701 = vpack.c.bf16 %v682, %v681
        %v702 = vpack.c.bf16 %v684, %v683
        %v703 = vpack.c.bf16 %v686, %v685
        %704 = vmatprep.subr.bf16.mxu0 0
        %705 = vmatpush1.bf16.xpose.msra.mxu0 %v695
        %706 = vmatprep.subr.bf16.mxu0 0
        %707 = vmatpush1.bf16.xpose.msra.mxu0 %v694
        %708 = vmatprep.subr.bf16.mxu0 0
        %709 = vmatpush1.bf16.xpose.msra.mxu0 %v693
        %710 = vmatprep.subr.bf16.mxu0 0
        %711 = vmatpush1.bf16.xpose.msra.mxu0 %v692
        %712 = vmatprep.subr.bf16.mxu0 0
        %713 = vmatpush1.bf16.xpose.msra.mxu0 %v691
        %714 = vmatprep.subr.bf16.mxu0 0
        %715 = vmatpush1.bf16.xpose.msra.mxu0 %v690
        %716 = vmatprep.subr.bf16.mxu0 0
        %717 = vmatpush1.bf16.xpose.msra.mxu0 %v689
        %718 = vmatprep.subr.bf16.mxu0 0
        %719 = vmatpush1.bf16.xpose.msra.mxu0 %v688
        %720 = vmatprep.subr.bf16.mxu0 0
        %721 = vmatpush2.bf16.xpose.msra.mxu0 %v703
        %722 = vmatprep.subr.bf16.mxu0 0
        %723 = vmatpush2.bf16.xpose.msra.mxu0 %v702
        %724 = vmatprep.subr.bf16.mxu0 0
        %725 = vmatpush2.bf16.xpose.msra.mxu0 %v701
        %726 = vmatprep.subr.bf16.mxu0 0
        %727 = vmatpush2.bf16.xpose.msra.mxu0 %v700
        %728 = vmatprep.subr.bf16.mxu0 0
        %729 = vmatpush2.bf16.xpose.msra.mxu0 %v699
        %730 = vmatprep.subr.bf16.mxu0 0
        %731 = vmatpush2.bf16.xpose.msra.mxu0 %v698
        %732 = vmatprep.subr.bf16.mxu0 0
        %733 = vmatpush2.bf16.xpose.msra.mxu0 %v697
        %734 = vmatprep.subr.bf16.mxu0 0
        %735 = vmatpush2.bf16.xpose.msra.mxu0 %v696
        %736 = vmatprep.mubr.bf16.mxu0 0
        %737 = vmatmul.mubr.bf16.gmra.mxu0 %v687
        %v738 = vpop.f32.mrf.mxu0
        %v739 = vadd.f32 0.0, %v738
        %v740 = vpop.f32.mrf.mxu0
        %v741 = vadd.f32 0.0, %v740
        %v742 = vpop.f32.mrf.mxu0
        %v743 = vpop.f32.mrf.mxu0
        %744 = vdwg.mxu0
        %v745 = vrot.slane %v739, 4
        %v746 = vadd.f32 %v739, %v745
        %v747 = vrot.slane %v746, 2
        %v748 = vadd.f32 %v746, %v747
        %v749 = vrot.slane %v748, 1
        %v750 = vadd.f32 %v748, %v749
        %v751 = vrot.slane %v741, 4
        %v752 = vadd.f32 %v741, %v751
        %v753 = vrot.slane %v752, 2
        %v754 = vadd.f32 %v752, %v753
        %v755 = vrot.slane %v754, 1
        %v756 = vadd.f32 %v754, %v755
        %s757 = sld [smem:[#allocation2]]
        %v758 = vstv %s757
        %v759 = vadd.f32 %v750, %v758
        %v760 = vadd.f32 %v756, %v758
        %v761 = vxor.u32 %v759, 2147483648
        %v762 = vxor.u32 %v760, 2147483648
        %v763 = vmul.f32 %v761, 1.442695
        %v764 = vpow.pop %v763
        %v765 = vmul.f32 %v762, 1.442695
        %v766 = vpow.pop %v765
        %v767 = vadd.f32 %v764, 1.0
        %v768 = vadd.f32 %v766, 1.0
        %v769 = vrcp.pop %v767
        %v770 = vmul.f32 1.0, %v769
        %v771 = vrcp.pop %v768
        %v772 = vmul.f32 1.0, %v771
        %v775 = vcombine.low %v770, %v772
        %v777 = vunpack.c.l.s4 1966171168
        %v778 = vunpack.c.0.s8 %v777
        %v779 = vlaneseq
        %v780 = vshrl.u32 %v779, 7
        %v781 = vsub.s32 %v778, %v780
        %v782 = vrot.slane %v775, %v781
        %v784 = vunpack.c.l.s4 1966171168
        %v785 = vunpack.c.0.s8 %v784
        %v786 = vlaneseq
        %v787 = vshrl.u32 %v786, 7
        %v788 = vsub.s32 %v785, %v787
        %v789 = vrot.slane %v782, %v788
        %v791 = vlaneseq
        %vm792 = vcmp.ge.s32.totalorder %v791, 0
        %vm793 = vcmp.lt.s32.totalorder %v791, 256
        %vm794 = vmand %vm792, %vm793
        %795 = vst.msk [vmem:[%s259] sm:$0x3] %vm794, %v789
        %s796 = sand.u32 %s142, 1
        %s797 = scalar_lea.sflag [#allocation5], %s796
        %s798 = sand.u32 %s142, 1
        %s799 = smul.addr %s798, 2
        %s800 = scalar_lea.vmem [#allocation8], %s799
        // Predicated region
        $region49: #{tpu_custom_call.1} parent=39 // pred_check
          %p801 = pneg %p152
        $region50: #{tpu_custom_call.1} parent=39 // pred_check_branch
          %803 = sbr.rel (%p801) target = $region52
        $region51: #{tpu_custom_call.1} parent=39 // pred_region
          %s804 = smul.u32 2, %s24
          %s806 = ssub.s32 32, 32
          %807 = vsyncadd %s797, %s806
          %s808 = smul.addr %s804, 16
          %s809 = scalar_lea.hbm %s5, %s808
          %s811 = sshll.u32 %s800, 4
          %s812 = int_to_ptr.vmem [resolvable:$true] %s811
          %814 = dma.vmem_to_hbm [thread:$0]  %s812, 32, %s809, %s797
        $region52: #{tpu_custom_call.1} parent=39 // pred_fallthru
          _
      $region40: #{tpu_custom_call.1} parent=5 // pred_fallthru
        _
      %p815 = scmp.le.s32.totalorder 2, %s19
      // Predicated region
      $region53: #{tpu_custom_call.1} parent=5 // pred_check
        %p816 = pneg %p815
      $region54: #{tpu_custom_call.1} parent=5 // pred_check_branch
        %818 = sbr.rel (%p816) target = $region56
      $region55: #{tpu_custom_call.1} parent=5 // pred_region
        %s819 = ssub.s32 %s19, 2
        // Predicated region
        $region57: #{tpu_custom_call.1} parent=55 // pred_check
          %p820 = pneg %p158
        $region58: #{tpu_custom_call.1} parent=55 // pred_check_branch
          %822 = sbr.rel (%p820) target = $region60
        $region59: #{tpu_custom_call.1} parent=55 // pred_region
          %s823 = sand.u32 %s143, 1
          %s824 = scalar_lea.sflag [#allocation5], %s823
          %s825 = sand.u32 %s143, 1
          %s826 = smul.addr %s825, 2
          %s827 = scalar_lea.vmem [#allocation8], %s826
          %828 = dma.done %s824, 32
        $region60: #{tpu_custom_call.1} parent=55 // pred_fallthru
          _
      $region56: #{tpu_custom_call.1} parent=5 // pred_fallthru
        _
    $region6: #{tpu_custom_call.1} parent=1 // loop_footer
      %s23 = sadd.s32 1, %s19
    $region7: #{tpu_custom_call.1} parent=1 // loop_footer_branch
      %18 = sbr.rel target = $region3
    $region8: #{tpu_custom_call.1} parent=1 // loop_exit
      _
    %829 = vsyncpa [#allocation4], 1
    %s830 = scalar_lea.sflag [#allocation4], 1
    %831 = vsyncpa %s830, 1
    %832 = vsyncpa [#allocation7], 1
    %833 = vsyncpa [#allocation5], 1
    %s834 = scalar_lea.sflag [#allocation5], 1
    %835 = vsyncpa %s834, 1

</llo_original>
